<compile_context>
chip_gen: v6e
topology: v6e:2x2x1
jax: 0.10.0
libtpu: 0.0.40
codegen_flags: <defaults>
</compile_context>

<pallas_src>
import jax
import jax.numpy as jnp
from jax.experimental import pallas as pl
from jax.experimental.pallas import tpu as pltpu

DIM_INS = 16
DIM_CLS = 16
DIM_IN = 768
NUM_CLS = 501
NUM_CLS_PAD = 512  # padded to a multiple of 128 lanes


def _round_up(x, m):
    return (x + m - 1) // m * m


def pool_assigner_kernel(instance_ref, bias_ref, v_ref, out_ref):
    # instance_ref: (TB, 768) f32 VMEM  activations (the only real HBM traffic)
    # bias_ref:     (TB, 1)   f32 VMEM  folded per-row class scalar + bias
    # v_ref:        (768, 1)  f32 VMEM  folded instance weight column
    # out_ref:      (TB, 1)   f32 VMEM
    ins = jnp.dot(instance_ref[...], v_ref[...],
                  preferred_element_type=jnp.float32)          # (TB, 1) matvec on MXU
    out_ref[...] = jax.nn.sigmoid(ins + bias_ref[...])         # EUP sigmoid


def _fold_params(params):
    w_a = params["w_asg"][:DIM_INS]                   # (16, 1)
    w_b = params["w_asg"][DIM_INS:]                   # (16, 1)
    v = params["w_ins"] @ w_a                         # (768, 1)
    t_flat = (params["table_pad"] @ w_b).reshape(-1)  # (512,) padded rows stay 0
    c = (params["b_ins"] @ w_a + params["b_asg"]).reshape(())  # scalar
    return v, t_flat, c


def pool_assigner(instance, weight_idx, params, tb_max=2048):
    B = instance.shape[0]

    # Tile selection: big tile to amortize per-step overhead, but aim for
    # >= 4 grid steps so both v7x TensorCores get work; keep tb a multiple of
    # 8 (sublane rule) or fall back to a single full-array block for tiny B.
    tb = min(tb_max, _round_up(pl.cdiv(B, 4), 8))
    if tb >= B:
        tb = B            # block == full array dims: always layout-legal
    grid = pl.cdiv(B, tb)  # ragged last block instead of padding the array

    x = instance.astype(jnp.float32)
    v, t_flat, c = _fold_params(params)
    # Wrapper-side class gather (+ folded bias).  Indices outside [0, 511]
    # clamp (jnp.take default); 501..511 map to zero-padded table rows,
    # matching the original one-hot formulation's "contribute 0" behavior.
    idx = weight_idx.astype(jnp.int32)
    g = (jnp.take(t_flat, idx, axis=0) + c).reshape(B, 1).astype(jnp.float32)

    # Scoped-VMEM budget: double-buffered instance tile + two lane-padded
    # (tb,1) narrow blocks + slack.  ~20 MiB at tb=2048 (OK on v5e/v6e/v7x).
    inst_tile = tb * DIM_IN * 4
    narrow_tile = _round_up(max(tb, 8), 8) * 128 * 4   # (tb,1) pads to 128 lanes
    vmem_bytes = 2 * (inst_tile + 2 * narrow_tile) + (4 << 20)
    vmem_bytes = int(min(max(vmem_bytes, 16 << 20), 48 << 20))

    cost = pl.CostEstimate(
        flops=2 * B * DIM_IN,
        transcendentals=B,
        bytes_accessed=B * (DIM_IN * 4 + 4 + 4) + DIM_IN * 4,
    )

    out = pl.pallas_call(
        pool_assigner_kernel,
        out_shape=jax.ShapeDtypeStruct((B, 1), jnp.float32),
        grid=(grid,),
        in_specs=[
            pl.BlockSpec((tb, DIM_IN), lambda i: (i, 0)),     # instance tile
            pl.BlockSpec((tb, 1), lambda i: (i, 0)),          # per-row class+bias
            pl.BlockSpec((DIM_IN, 1), lambda i: (0, 0)),      # v (VMEM-resident)
        ],
        out_specs=pl.BlockSpec((tb, 1), lambda i: (i, 0)),
        compiler_params=pltpu.CompilerParams(
            dimension_semantics=("parallel",),
            vmem_limit_bytes=vmem_bytes),
        cost_estimate=cost,
    )(x, g, v)
    return out


def make_params(key):
    k1, k2, k3, k4, k5 = jax.random.split(key, 5)
    # Embedding(501, 16): N(0, 1) like torch default.
    table = jax.random.normal(k1, (NUM_CLS, DIM_CLS), jnp.float32)
    table_pad = jnp.zeros((NUM_CLS_PAD, DIM_CLS), jnp.float32).at[:NUM_CLS].set(table)
    # Linear(768, 16): uniform(-1/sqrt(768), 1/sqrt(768)) like torch default.
    bnd_ins = 1.0 / jnp.sqrt(jnp.float32(DIM_IN))
    w_ins = jax.random.uniform(k2, (DIM_IN, DIM_INS), jnp.float32, -bnd_ins, bnd_ins)
    b_ins = jax.random.uniform(k3, (1, DIM_INS), jnp.float32, -bnd_ins, bnd_ins)
    # Linear(32, 1)
    dim_cat = DIM_INS + DIM_CLS
    bnd_asg = 1.0 / jnp.sqrt(jnp.float32(dim_cat))
    w_asg = jax.random.uniform(k4, (dim_cat, 1), jnp.float32, -bnd_asg, bnd_asg)
    b_asg = jax.random.uniform(k5, (1, 1), jnp.float32, -bnd_asg, bnd_asg)
    return dict(table_pad=table_pad, w_ins=w_ins, b_ins=b_ins,
                w_asg=w_asg, b_asg=b_asg)


def pool_assigner_ref(instance, weight_idx, params):
    # Un-folded reference, matching the PyTorch module op-for-op.
    ins = instance @ params["w_ins"] + params["b_ins"]
    cls = params["table_pad"][weight_idx]
    agg = jnp.concatenate([ins, cls], axis=-1)
    res = agg @ params["w_asg"] + params["b_asg"]
    return jax.nn.sigmoid(res)


if __name__ == "__main__":
    key = jax.random.PRNGKey(0)
    kp, kx, kw = jax.random.split(key, 3)
    params = make_params(kp)

    # Small single-tile case.
    B = 8
    instance = jax.random.normal(kx, (B, DIM_IN), jnp.float32)
    weight_idx = jax.random.randint(kw, (B,), 0, NUM_CLS, jnp.int32)
    out = jax.block_until_ready(pool_assigner(instance, weight_idx, params))
    ref = pool_assigner_ref(instance, weight_idx, params)
    assert out.shape == (B, 1)
    assert jnp.allclose(out, ref, atol=2e-5, rtol=2e-5), (out, ref)

    # Multi-tile case exercising the grid + ragged last block (no pad copy).
    B2 = 300
    kx2, kw2 = jax.random.split(jax.random.PRNGKey(1))
    instance2 = jax.random.normal(kx2, (B2, DIM_IN), jnp.float32)
    weight_idx2 = jax.random.randint(kw2, (B2,), 0, NUM_CLS, jnp.int32)
    out2 = jax.block_until_ready(
        pool_assigner(instance2, weight_idx2, params, tb_max=128))
    ref2 = pool_assigner_ref(instance2, weight_idx2, params)
    assert out2.shape == (B2, 1)
    assert jnp.allclose(out2, ref2, atol=2e-5, rtol=2e-5)

    print("KERNEL_OK")
</pallas_src>

<mosaic_0001>
module attributes {stable_mosaic.version = 11 : i64} {
  func.func @pool_assigner_kernel(%arg0: i32, %arg1: memref<8x768xf32, #tpu.memory_space<vmem>>, %arg2: memref<8x1xf32, #tpu.memory_space<vmem>>, %arg3: memref<768x1xf32, #tpu.memory_space<vmem>>, %arg4: memref<8x1xf32, #tpu.memory_space<vmem>>) attributes {dimension_semantics = [#tpu.dimension_semantics<parallel>], iteration_bounds = array<i64: 1>, scalar_prefetch = 0 : i64, scratch_operands = 0 : i64, tpu.core_type = #tpu.core_type<tc>, window_params = [{transform_indices = @transform_0, window_bounds = array<i64: 8, 768>}, {transform_indices = @transform_1, window_bounds = array<i64: 8, 1>}, {pipeline_mode = #tpu.pipeline_mode<synchronous>, transform_indices = @transform_2, window_bounds = array<i64: 768, 1>}, {transform_indices = @transform_3, window_bounds = array<i64: 8, 1>}]} {
    %c0 = arith.constant 0 : index
    %c0_0 = arith.constant 0 : index
    %0 = vector.load %arg1[%c0, %c0_0] : memref<8x768xf32, #tpu.memory_space<vmem>>, vector<8x768xf32>
    %c0_1 = arith.constant 0 : index
    %c0_2 = arith.constant 0 : index
    %1 = vector.load %arg3[%c0_1, %c0_2] : memref<768x1xf32, #tpu.memory_space<vmem>>, vector<768x1xf32>
    %cst = arith.constant dense<0.000000e+00> : vector<8x1xf32>
    %2 = tpu.matmul %0, %1, %cst {dimension_numbers = #tpu.dot_dimension_numbers<[1], [0], [0], [1], [0, 0, 1, 1], [], []>} : vector<8x768xf32>, vector<768x1xf32>, vector<8x1xf32> -> vector<8x1xf32>
    %c0_3 = arith.constant 0 : index
    %c0_4 = arith.constant 0 : index
    %3 = vector.load %arg2[%c0_3, %c0_4] : memref<8x1xf32, #tpu.memory_space<vmem>>, vector<8x1xf32>
    %4 = arith.addf %2, %3 : vector<8x1xf32>
    %5 = arith.negf %4 : vector<8x1xf32>
    %6 = math.exp %5 : vector<8x1xf32>
    %cst_5 = arith.constant 1.000000e+00 : f32
    %7 = vector.broadcast %cst_5 : f32 to vector<8x1xf32>
    %8 = arith.addf %7, %6 : vector<8x1xf32>
    %9 = arith.divf %7, %8 : vector<8x1xf32>
    %c0_6 = arith.constant 0 : index
    %c0_7 = arith.constant 0 : index
    %10 = vector.load %arg4[%c0_6, %c0_7] : memref<8x1xf32, #tpu.memory_space<vmem>>, vector<8x1xf32>
    tpu.vector_store %arg4[%c0_6, %c0_7], %9 {strides = array<i32>} : memref<8x1xf32, #tpu.memory_space<vmem>>, vector<8x1xf32>,
    return
  }
  func.func @transform_0(%arg0: i32) -> (i32, i32) {
    %c0_i32 = arith.constant 0 : i32
    %c0_i32_0 = arith.constant 0 : i32
    return %arg0, %c0_i32 : i32, i32
  }
  func.func @transform_1(%arg0: i32) -> (i32, i32) {
    %c0_i32 = arith.constant 0 : i32
    %c0_i32_0 = arith.constant 0 : i32
    return %arg0, %c0_i32 : i32, i32
  }
  func.func @transform_2(%arg0: i32) -> (i32, i32) {
    %c0_i32 = arith.constant 0 : i32
    %c0_i32_0 = arith.constant 0 : i32
    %c0_i32_1 = arith.constant 0 : i32
    return %c0_i32, %c0_i32_0 : i32, i32
  }
  func.func @transform_3(%arg0: i32) -> (i32, i32) {
    %c0_i32 = arith.constant 0 : i32
    %c0_i32_0 = arith.constant 0 : i32
    return %arg0, %c0_i32 : i32, i32
  }
}

</mosaic_0001>

<llo_original>
// kernel: tpu_custom_call.1
$region0: #{tpu_custom_call.1}
  #allocation0 [shape = 'u32[]', space=smem, size = 0x4, offset = 0x4, fixed_abs, tag = 'smem constant byte address 0x4 - core index']
  #allocation1 [shape = 'u32[144,128]{1,0:T(1,128)}', space=vmem, size = 0x12000, scoped, tag = 'internal scratch']
  %s0 = inlined_call_operand.vmem [shape: f32[8,768], index: 0, kind: input, shape index: {}]
  %s1 = inlined_call_operand.vmem [shape: f32[8,1], index: 1, kind: input, shape index: {}]
  %s2 = inlined_call_operand.vmem [shape: f32[768,1], index: 2, kind: input, shape index: {}]
  %s3 = inlined_call_operand.vmem [shape: f32[8,1], index: 3, kind: output, shape index: {}]
  %s4 = sld [smem:[#allocation0]]
  $region22: #{tpu_custom_call.1} parent=0
    _
  %s6 = ssub.s32 1, %s4
  %s7 = scalar_select 0, %s6, %s4
  // Predicated region
  $region2: #{tpu_custom_call.1} parent=0 // pred_check
    _
  $region3: #{tpu_custom_call.1} parent=0 // pred_check_branch
    %9 = sbr.rel (0) target = $region5
  $region4: #{tpu_custom_call.1} parent=0 // pred_region
    _
  $region5: #{tpu_custom_call.1} parent=0 // pred_fallthru
    _
  // Predicated region
  $region6: #{tpu_custom_call.1} parent=0 // pred_check
    _
  $region7: #{tpu_custom_call.1} parent=0 // pred_check_branch
    %11 = sbr.rel (0) target = $region9
  $region8: #{tpu_custom_call.1} parent=0 // pred_region
    _
  $region9: #{tpu_custom_call.1} parent=0 // pred_fallthru
    _
  // Predicated region
  $region10: #{tpu_custom_call.1} parent=0 // pred_check
    _
  $region11: #{tpu_custom_call.1} parent=0 // pred_check_branch
    %13 = sbr.rel (0) target = $region13
  $region12: #{tpu_custom_call.1} parent=0 // pred_region
    _
  $region13: #{tpu_custom_call.1} parent=0 // pred_fallthru
    _
  %v14 = vld [vmem:[%s0] sm:$0xff]
  %v15 = vld [vmem:[%s0 + $0x8] sm:$0xff]
  %v16 = vld [vmem:[%s0 + $0x10] sm:$0xff]
  %v17 = vld [vmem:[%s0 + $0x18] sm:$0xff]
  %v18 = vld [vmem:[%s0 + $0x20] sm:$0xff]
  %v19 = vld [vmem:[%s0 + $0x28] sm:$0xff]
  %v20 = vld [vmem:[%s2] sm:$0xff]
  %v21 = vld [vmem:[%s2 + $0x8] sm:$0xff]
  %v22 = vld [vmem:[%s2 + $0x10] sm:$0xff]
  %v23 = vld [vmem:[%s2 + $0x18] sm:$0xff]
  %v24 = vld [vmem:[%s2 + $0x20] sm:$0xff]
  %v25 = vld [vmem:[%s2 + $0x28] sm:$0xff]
  %v26 = vld [vmem:[%s2 + $0x30] sm:$0xff]
  %v27 = vld [vmem:[%s2 + $0x38] sm:$0xff]
  %v28 = vld [vmem:[%s2 + $0x40] sm:$0xff]
  %v29 = vld [vmem:[%s2 + $0x48] sm:$0xff]
  %v30 = vld [vmem:[%s2 + $0x50] sm:$0xff]
  %v31 = vld [vmem:[%s2 + $0x58] sm:$0xff]
  %v32 = vld [vmem:[%s2 + $0x60] sm:$0xff]
  %v33 = vld [vmem:[%s2 + $0x68] sm:$0xff]
  %v34 = vld [vmem:[%s2 + $0x70] sm:$0xff]
  %v35 = vld [vmem:[%s2 + $0x78] sm:$0xff]
  %v36 = vld [vmem:[%s2 + $0x80] sm:$0xff]
  %v37 = vld [vmem:[%s2 + $0x88] sm:$0xff]
  %v38 = vld [vmem:[%s2 + $0x90] sm:$0xff]
  %v39 = vld [vmem:[%s2 + $0x98] sm:$0xff]
  %v40 = vld [vmem:[%s2 + $0xa0] sm:$0xff]
  %v41 = vld [vmem:[%s2 + $0xa8] sm:$0xff]
  %v42 = vld [vmem:[%s2 + $0xb0] sm:$0xff]
  %v43 = vld [vmem:[%s2 + $0xb8] sm:$0xff]
  %v44 = vld [vmem:[%s2 + $0xc0] sm:$0xff]
  %v45 = vld [vmem:[%s2 + $0xc8] sm:$0xff]
  %v46 = vld [vmem:[%s2 + $0xd0] sm:$0xff]
  %v47 = vld [vmem:[%s2 + $0xd8] sm:$0xff]
  %v48 = vld [vmem:[%s2 + $0xe0] sm:$0xff]
  %v49 = vld [vmem:[%s2 + $0xe8] sm:$0xff]
  %v50 = vld [vmem:[%s2 + $0xf0] sm:$0xff]
  %v51 = vld [vmem:[%s2 + $0xf8] sm:$0xff]
  %v52 = vld [vmem:[%s2 + $0x100] sm:$0xff]
  %v53 = vld [vmem:[%s2 + $0x108] sm:$0xff]
  %v54 = vld [vmem:[%s2 + $0x110] sm:$0xff]
  %v55 = vld [vmem:[%s2 + $0x118] sm:$0xff]
  %v56 = vld [vmem:[%s2 + $0x120] sm:$0xff]
  %v57 = vld [vmem:[%s2 + $0x128] sm:$0xff]
  %v58 = vld [vmem:[%s2 + $0x130] sm:$0xff]
  %v59 = vld [vmem:[%s2 + $0x138] sm:$0xff]
  %v60 = vld [vmem:[%s2 + $0x140] sm:$0xff]
  %v61 = vld [vmem:[%s2 + $0x148] sm:$0xff]
  %v62 = vld [vmem:[%s2 + $0x150] sm:$0xff]
  %v63 = vld [vmem:[%s2 + $0x158] sm:$0xff]
  %v64 = vld [vmem:[%s2 + $0x160] sm:$0xff]
  %v65 = vld [vmem:[%s2 + $0x168] sm:$0xff]
  %v66 = vld [vmem:[%s2 + $0x170] sm:$0xff]
  %v67 = vld [vmem:[%s2 + $0x178] sm:$0xff]
  %v68 = vld [vmem:[%s2 + $0x180] sm:$0xff]
  %v69 = vld [vmem:[%s2 + $0x188] sm:$0xff]
  %v70 = vld [vmem:[%s2 + $0x190] sm:$0xff]
  %v71 = vld [vmem:[%s2 + $0x198] sm:$0xff]
  %v72 = vld [vmem:[%s2 + $0x1a0] sm:$0xff]
  %v73 = vld [vmem:[%s2 + $0x1a8] sm:$0xff]
  %v74 = vld [vmem:[%s2 + $0x1b0] sm:$0xff]
  %v75 = vld [vmem:[%s2 + $0x1b8] sm:$0xff]
  %v76 = vld [vmem:[%s2 + $0x1c0] sm:$0xff]
  %v77 = vld [vmem:[%s2 + $0x1c8] sm:$0xff]
  %v78 = vld [vmem:[%s2 + $0x1d0] sm:$0xff]
  %v79 = vld [vmem:[%s2 + $0x1d8] sm:$0xff]
  %v80 = vld [vmem:[%s2 + $0x1e0] sm:$0xff]
  %v81 = vld [vmem:[%s2 + $0x1e8] sm:$0xff]
  %v82 = vld [vmem:[%s2 + $0x1f0] sm:$0xff]
  %v83 = vld [vmem:[%s2 + $0x1f8] sm:$0xff]
  %v84 = vld [vmem:[%s2 + $0x200] sm:$0xff]
  %v85 = vld [vmem:[%s2 + $0x208] sm:$0xff]
  %v86 = vld [vmem:[%s2 + $0x210] sm:$0xff]
  %v87 = vld [vmem:[%s2 + $0x218] sm:$0xff]
  %v88 = vld [vmem:[%s2 + $0x220] sm:$0xff]
  %v89 = vld [vmem:[%s2 + $0x228] sm:$0xff]
  %v90 = vld [vmem:[%s2 + $0x230] sm:$0xff]
  %v91 = vld [vmem:[%s2 + $0x238] sm:$0xff]
  %v92 = vld [vmem:[%s2 + $0x240] sm:$0xff]
  %v93 = vld [vmem:[%s2 + $0x248] sm:$0xff]
  %v94 = vld [vmem:[%s2 + $0x250] sm:$0xff]
  %v95 = vld [vmem:[%s2 + $0x258] sm:$0xff]
  %v96 = vld [vmem:[%s2 + $0x260] sm:$0xff]
  %v97 = vld [vmem:[%s2 + $0x268] sm:$0xff]
  %v98 = vld [vmem:[%s2 + $0x270] sm:$0xff]
  %v99 = vld [vmem:[%s2 + $0x278] sm:$0xff]
  %v100 = vld [vmem:[%s2 + $0x280] sm:$0xff]
  %v101 = vld [vmem:[%s2 + $0x288] sm:$0xff]
  %v102 = vld [vmem:[%s2 + $0x290] sm:$0xff]
  %v103 = vld [vmem:[%s2 + $0x298] sm:$0xff]
  %v104 = vld [vmem:[%s2 + $0x2a0] sm:$0xff]
  %v105 = vld [vmem:[%s2 + $0x2a8] sm:$0xff]
  %v106 = vld [vmem:[%s2 + $0x2b0] sm:$0xff]
  %v107 = vld [vmem:[%s2 + $0x2b8] sm:$0xff]
  %v108 = vld [vmem:[%s2 + $0x2c0] sm:$0xff]
  %v109 = vld [vmem:[%s2 + $0x2c8] sm:$0xff]
  %v110 = vld [vmem:[%s2 + $0x2d0] sm:$0xff]
  %v111 = vld [vmem:[%s2 + $0x2d8] sm:$0xff]
  %v112 = vld [vmem:[%s2 + $0x2e0] sm:$0xff]
  %v113 = vld [vmem:[%s2 + $0x2e8] sm:$0xff]
  %v114 = vld [vmem:[%s2 + $0x2f0] sm:$0xff]
  %v115 = vld [vmem:[%s2 + $0x2f8] sm:$0xff]
  %v116 = vld [vmem:[%s1] sm:$0xff]
  %117 = vmatprep.subr.mxu0 0.0
  %118 = vmatpush1.msra.mxu0 %v35
  %119 = vmatprep.subr.mxu0 0.0
  %120 = vmatpush1.msra.mxu0 %v34
  %121 = vmatprep.subr.mxu0 0.0
  %122 = vmatpush1.msra.mxu0 %v33
  %123 = vmatprep.subr.mxu0 0.0
  %124 = vmatpush1.msra.mxu0 %v32
  %125 = vmatprep.subr.mxu0 0.0
  %126 = vmatpush1.msra.mxu0 %v31
  %127 = vmatprep.subr.mxu0 0.0
  %128 = vmatpush1.msra.mxu0 %v30
  %129 = vmatprep.subr.mxu0 0.0
  %130 = vmatpush1.msra.mxu0 %v29
  %131 = vmatprep.subr.mxu0 0.0
  %132 = vmatpush1.msra.mxu0 %v28
  %133 = vmatprep.subr.mxu0 0.0
  %134 = vmatpush1.msra.mxu0 %v27
  %135 = vmatprep.subr.mxu0 0.0
  %136 = vmatpush1.msra.mxu0 %v26
  %137 = vmatprep.subr.mxu0 0.0
  %138 = vmatpush1.msra.mxu0 %v25
  %139 = vmatprep.subr.mxu0 0.0
  %140 = vmatpush1.msra.mxu0 %v24
  %141 = vmatprep.subr.mxu0 0.0
  %142 = vmatpush1.msra.mxu0 %v23
  %143 = vmatprep.subr.mxu0 0.0
  %144 = vmatpush1.msra.mxu0 %v22
  %145 = vmatprep.subr.mxu0 0.0
  %146 = vmatpush1.msra.mxu0 %v21
  %147 = vmatprep.subr.mxu0 0.0
  %148 = vmatpush1.msra.mxu0 %v20
  %149 = vmatprep.subr.mxu0 0.0
  %150 = vmatpush2.msra.mxu0 %v51
  %151 = vmatprep.subr.mxu0 0.0
  %152 = vmatpush2.msra.mxu0 %v50
  %153 = vmatprep.subr.mxu0 0.0
  %154 = vmatpush2.msra.mxu0 %v49
  %155 = vmatprep.subr.mxu0 0.0
  %156 = vmatpush2.msra.mxu0 %v48
  %157 = vmatprep.subr.mxu0 0.0
  %158 = vmatpush2.msra.mxu0 %v47
  %159 = vmatprep.subr.mxu0 0.0
  %160 = vmatpush2.msra.mxu0 %v46
  %161 = vmatprep.subr.mxu0 0.0
  %162 = vmatpush2.msra.mxu0 %v45
  %163 = vmatprep.subr.mxu0 0.0
  %164 = vmatpush2.msra.mxu0 %v44
  %165 = vmatprep.subr.mxu0 0.0
  %166 = vmatpush2.msra.mxu0 %v43
  %167 = vmatprep.subr.mxu0 0.0
  %168 = vmatpush2.msra.mxu0 %v42
  %169 = vmatprep.subr.mxu0 0.0
  %170 = vmatpush2.msra.mxu0 %v41
  %171 = vmatprep.subr.mxu0 0.0
  %172 = vmatpush2.msra.mxu0 %v40
  %173 = vmatprep.subr.mxu0 0.0
  %174 = vmatpush2.msra.mxu0 %v39
  %175 = vmatprep.subr.mxu0 0.0
  %176 = vmatpush2.msra.mxu0 %v38
  %177 = vmatprep.subr.mxu0 0.0
  %178 = vmatpush2.msra.mxu0 %v37
  %179 = vmatprep.subr.mxu0 0.0
  %180 = vmatpush2.msra.mxu0 %v36
  %181 = vmatprep.mubr.f32.mxu0 %v15
  %182 = vmatmul.mubr.f32.gmra.mxu0 %v14
  %v183 = vpop.f32.mrf.mxu0
  %v184 = vadd.f32 %v116, %v183
  %v185 = vpop.f32.mrf.mxu0
  %186 = vdwg.mxu0
  %187 = vmatprep.subr.mxu0 0.0
  %188 = vmatpush1.msra.mxu0 %v67
  %189 = vmatprep.subr.mxu0 0.0
  %190 = vmatpush1.msra.mxu0 %v66
  %191 = vmatprep.subr.mxu0 0.0
  %192 = vmatpush1.msra.mxu0 %v65
  %193 = vmatprep.subr.mxu0 0.0
  %194 = vmatpush1.msra.mxu0 %v64
  %195 = vmatprep.subr.mxu0 0.0
  %196 = vmatpush1.msra.mxu0 %v63
  %197 = vmatprep.subr.mxu0 0.0
  %198 = vmatpush1.msra.mxu0 %v62
  %199 = vmatprep.subr.mxu0 0.0
  %200 = vmatpush1.msra.mxu0 %v61
  %201 = vmatprep.subr.mxu0 0.0
  %202 = vmatpush1.msra.mxu0 %v60
  %203 = vmatprep.subr.mxu0 0.0
  %204 = vmatpush1.msra.mxu0 %v59
  %205 = vmatprep.subr.mxu0 0.0
  %206 = vmatpush1.msra.mxu0 %v58
  %207 = vmatprep.subr.mxu0 0.0
  %208 = vmatpush1.msra.mxu0 %v57
  %209 = vmatprep.subr.mxu0 0.0
  %210 = vmatpush1.msra.mxu0 %v56
  %211 = vmatprep.subr.mxu0 0.0
  %212 = vmatpush1.msra.mxu0 %v55
  %213 = vmatprep.subr.mxu0 0.0
  %214 = vmatpush1.msra.mxu0 %v54
  %215 = vmatprep.subr.mxu0 0.0
  %216 = vmatpush1.msra.mxu0 %v53
  %217 = vmatprep.subr.mxu0 0.0
  %218 = vmatpush1.msra.mxu0 %v52
  %219 = vmatprep.subr.mxu0 0.0
  %220 = vmatpush2.msra.mxu0 %v83
  %221 = vmatprep.subr.mxu0 0.0
  %222 = vmatpush2.msra.mxu0 %v82
  %223 = vmatprep.subr.mxu0 0.0
  %224 = vmatpush2.msra.mxu0 %v81
  %225 = vmatprep.subr.mxu0 0.0
  %226 = vmatpush2.msra.mxu0 %v80
  %227 = vmatprep.subr.mxu0 0.0
  %228 = vmatpush2.msra.mxu0 %v79
  %229 = vmatprep.subr.mxu0 0.0
  %230 = vmatpush2.msra.mxu0 %v78
  %231 = vmatprep.subr.mxu0 0.0
  %232 = vmatpush2.msra.mxu0 %v77
  %233 = vmatprep.subr.mxu0 0.0
  %234 = vmatpush2.msra.mxu0 %v76
  %235 = vmatprep.subr.mxu0 0.0
  %236 = vmatpush2.msra.mxu0 %v75
  %237 = vmatprep.subr.mxu0 0.0
  %238 = vmatpush2.msra.mxu0 %v74
  %239 = vmatprep.subr.mxu0 0.0
  %240 = vmatpush2.msra.mxu0 %v73
  %241 = vmatprep.subr.mxu0 0.0
  %242 = vmatpush2.msra.mxu0 %v72
  %243 = vmatprep.subr.mxu0 0.0
  %244 = vmatpush2.msra.mxu0 %v71
  %245 = vmatprep.subr.mxu0 0.0
  %246 = vmatpush2.msra.mxu0 %v70
  %247 = vmatprep.subr.mxu0 0.0
  %248 = vmatpush2.msra.mxu0 %v69
  %249 = vmatprep.subr.mxu0 0.0
  %250 = vmatpush2.msra.mxu0 %v68
  %251 = vmatprep.mubr.f32.mxu0 %v17
  %252 = vmatmul.mubr.f32.gmra.mxu0 %v16
  %v253 = vpop.f32.mrf.mxu0
  %v254 = vadd.f32 %v184, %v253
  %v255 = vpop.f32.mrf.mxu0
  %256 = vdwg.mxu0
  %257 = vmatprep.subr.mxu0 0.0
  %258 = vmatpush1.msra.mxu0 %v99
  %259 = vmatprep.subr.mxu0 0.0
  %260 = vmatpush1.msra.mxu0 %v98
  %261 = vmatprep.subr.mxu0 0.0
  %262 = vmatpush1.msra.mxu0 %v97
  %263 = vmatprep.subr.mxu0 0.0
  %264 = vmatpush1.msra.mxu0 %v96
  %265 = vmatprep.subr.mxu0 0.0
  %266 = vmatpush1.msra.mxu0 %v95
  %267 = vmatprep.subr.mxu0 0.0
  %268 = vmatpush1.msra.mxu0 %v94
  %269 = vmatprep.subr.mxu0 0.0
  %270 = vmatpush1.msra.mxu0 %v93
  %271 = vmatprep.subr.mxu0 0.0
  %272 = vmatpush1.msra.mxu0 %v92
  %273 = vmatprep.subr.mxu0 0.0
  %274 = vmatpush1.msra.mxu0 %v91
  %275 = vmatprep.subr.mxu0 0.0
  %276 = vmatpush1.msra.mxu0 %v90
  %277 = vmatprep.subr.mxu0 0.0
  %278 = vmatpush1.msra.mxu0 %v89
  %279 = vmatprep.subr.mxu0 0.0
  %280 = vmatpush1.msra.mxu0 %v88
  %281 = vmatprep.subr.mxu0 0.0
  %282 = vmatpush1.msra.mxu0 %v87
  %283 = vmatprep.subr.mxu0 0.0
  %284 = vmatpush1.msra.mxu0 %v86
  %285 = vmatprep.subr.mxu0 0.0
  %286 = vmatpush1.msra.mxu0 %v85
  %287 = vmatprep.subr.mxu0 0.0
  %288 = vmatpush1.msra.mxu0 %v84
  %289 = vmatprep.subr.mxu0 0.0
  %290 = vmatpush2.msra.mxu0 %v115
  %291 = vmatprep.subr.mxu0 0.0
  %292 = vmatpush2.msra.mxu0 %v114
  %293 = vmatprep.subr.mxu0 0.0
  %294 = vmatpush2.msra.mxu0 %v113
  %295 = vmatprep.subr.mxu0 0.0
  %296 = vmatpush2.msra.mxu0 %v112
  %297 = vmatprep.subr.mxu0 0.0
  %298 = vmatpush2.msra.mxu0 %v111
  %299 = vmatprep.subr.mxu0 0.0
  %300 = vmatpush2.msra.mxu0 %v110
  %301 = vmatprep.subr.mxu0 0.0
  %302 = vmatpush2.msra.mxu0 %v109
  %303 = vmatprep.subr.mxu0 0.0
  %304 = vmatpush2.msra.mxu0 %v108
  %305 = vmatprep.subr.mxu0 0.0
  %306 = vmatpush2.msra.mxu0 %v107
  %307 = vmatprep.subr.mxu0 0.0
  %308 = vmatpush2.msra.mxu0 %v106
  %309 = vmatprep.subr.mxu0 0.0
  %310 = vmatpush2.msra.mxu0 %v105
  %311 = vmatprep.subr.mxu0 0.0
  %312 = vmatpush2.msra.mxu0 %v104
  %313 = vmatprep.subr.mxu0 0.0
  %314 = vmatpush2.msra.mxu0 %v103
  %315 = vmatprep.subr.mxu0 0.0
  %316 = vmatpush2.msra.mxu0 %v102
  %317 = vmatprep.subr.mxu0 0.0
  %318 = vmatpush2.msra.mxu0 %v101
  %319 = vmatprep.subr.mxu0 0.0
  %320 = vmatpush2.msra.mxu0 %v100
  %321 = vmatprep.mubr.f32.mxu0 %v19
  %322 = vmatmul.mubr.f32.gmra.mxu0 %v18
  %v323 = vpop.f32.mrf.mxu0
  %v324 = vadd.f32 %v254, %v323
  %v325 = vpop.f32.mrf.mxu0
  %326 = vdwg.mxu0
  %v327 = vxor.u32 %v324, 2147483648
  %v328 = vmul.f32 %v327, 1.442695
  %v329 = vpow.pop %v328
  %v330 = vadd.f32 %v329, 1.0
  %v331 = vrcp.pop %v330
  %v332 = vmul.f32 1.0, %v331
  %vm333 = vcmask 7168
  %334 = vst.msk [vmem:[%s3] sm:$0xff] %vm333, %v332
  // Predicated region
  $region14: #{tpu_custom_call.1} parent=0 // pred_check
    _
  $region15: #{tpu_custom_call.1} parent=0 // pred_check_branch
    %336 = sbr.rel (0) target = $region17
  $region16: #{tpu_custom_call.1} parent=0 // pred_region
    _
  $region17: #{tpu_custom_call.1} parent=0 // pred_fallthru
    _
  // Predicated region
  $region18: #{tpu_custom_call.1} parent=0 // pred_check
    _
  $region19: #{tpu_custom_call.1} parent=0 // pred_check_branch
    %338 = sbr.rel (0) target = $region21
  $region20: #{tpu_custom_call.1} parent=0 // pred_region
    _
  $region21: #{tpu_custom_call.1} parent=0 // pred_fallthru
    _

</llo_original>
